<compile_context>
chip_gen: v7x
topology: tpu7x:2x2x1
jax: 0.10.0
libtpu: 0.0.40
codegen_flags: <defaults>
</compile_context>

<pallas_src>
import numpy as np
import jax
import jax.numpy as jnp
from jax.experimental import pallas as pl
from jax.experimental.pallas import tpu as pltpu

NUM_CLASSES = 4
FOCAL_ALPHA = 0.25    # cfg.MODEL.SparseRCNN.ALPHA default
FOCAL_GAMMA = 2.0     # cfg.MODEL.SparseRCNN.GAMMA default
_LOGIT_PAD = -100.0   # sigmoid/softplus underflow -> padded elements give exactly 0
_LANES = 128
_TK_MAX = 4096        # focal tile rows (x128 lanes): bf16 block = 1 MiB -> tiny VMEM


def _cdiv(a, b):
    return -(-a // b)


def _round_up(a, b):
    return _cdiv(a, b) * b


# ------------------------------ Pallas kernel --------------------------------

def _criterion_kernel(x_ref, box_ref, ce_ref, giou_ref, l1_ref):
    """Fused per-head SetCriterion losses.

    Grid = (heads, focal K-tiles). Per step:
      x_ref   : (1, TK, 128) bf16  flattened focal logits tile (pad = -100)
      box_ref : (1, 8, Mp)   f32   sublanes 0-3 = matched src boxes,
                                   4-7 = matched GT boxes (image-normalized;
                                   padded columns are the unit box on both
                                   sides so they contribute exactly 0)
      ce_ref / giou_ref / l1_ref : (1, 1, 1) f32 per-head sums.

    The focal sum computed here is the all-negative (y == 0) term; the matched
    positive entries are corrected outside the kernel (tiny gather in XLA).
    """
    kt = pl.program_id(1)

    # -------- sigmoid focal loss with y = 0 over this logits tile -----------
    x = x_ref[...].astype(jnp.float32)
    e = jnp.exp(-jnp.abs(x))                       # shared by BCE and sigmoid
    one_pe = 1.0 + e
    ce0 = jnp.maximum(x, 0.0) + jnp.log(one_pe)    # stable BCE(x, y=0)
    inv1pe = pl.reciprocal(one_pe, approx=True)    # EUP slot, ~2^-12 rel. error
    p = jnp.where(x >= 0.0, inv1pe, e * inv1pe)    # sigmoid(x)
    if float(FOCAL_GAMMA).is_integer() and FOCAL_GAMMA >= 0:
        focal = p ** int(FOCAL_GAMMA)
    else:
        focal = jnp.exp(FOCAL_GAMMA * jnp.log(jnp.maximum(p, 1e-30)))
    partial = (1.0 - FOCAL_ALPHA) * jnp.sum(ce0 * focal, axis=(0, 1, 2),
                                            keepdims=True)

    @pl.when(kt == 0)
    def _init_ce():
        ce_ref[...] = jnp.zeros_like(ce_ref)

    ce_ref[...] += partial                         # resident across kt

    # -------- box losses: block is resident across kt, compute once ---------
    @pl.when(kt == 0)
    def _boxes():
        b = box_ref[...]                           # (1, 8, Mp) f32
        sx1, sy1, sx2, sy2 = (b[:, 0:1, :], b[:, 1:2, :],
                              b[:, 2:3, :], b[:, 3:4, :])
        tx1, ty1, tx2, ty2 = (b[:, 4:5, :], b[:, 5:6, :],
                              b[:, 6:7, :], b[:, 7:8, :])

        area_s = (sx2 - sx1) * (sy2 - sy1)
        area_t = (tx2 - tx1) * (ty2 - ty1)
        iw = jnp.maximum(jnp.minimum(sx2, tx2) - jnp.maximum(sx1, tx1), 0.0)
        ih = jnp.maximum(jnp.minimum(sy2, ty2) - jnp.maximum(sy1, ty1), 0.0)
        inter = iw * ih
        union = area_s + area_t - inter
        # guards give 0 (not NaN/inf) for degenerate boxes -- documented
        # deviation from the unguarded reference.
        iou = inter / jnp.where(union > 0.0, union, 1.0)
        cw = jnp.maximum(jnp.maximum(sx2, tx2) - jnp.minimum(sx1, tx1), 0.0)
        ch = jnp.maximum(jnp.maximum(sy2, ty2) - jnp.minimum(sy1, ty1), 0.0)
        area_c = cw * ch
        giou = iou - (area_c - union) / jnp.where(area_c > 0.0, area_c, 1.0)

        giou_ref[...] = jnp.sum(1.0 - giou, axis=(0, 1, 2), keepdims=True)
        l1_ref[...] = jnp.sum(jnp.abs(b[:, 0:4, :] - b[:, 4:8, :]),
                              axis=(0, 1, 2), keepdims=True)


# -------------------- exact focal terms for the XLA correction ---------------

def _focal_pos(x):
    """alpha * BCE(x, 1) * (1 - sigmoid(x))**gamma  (exact, XLA glue)."""
    ce1 = jnp.maximum(x, 0.0) - x + jnp.log1p(jnp.exp(-jnp.abs(x)))
    p = jax.nn.sigmoid(x)
    return FOCAL_ALPHA * ce1 * (1.0 - p) ** FOCAL_GAMMA


def _focal_neg(x):
    """(1 - alpha) * BCE(x, 0) * sigmoid(x)**gamma  (exact, XLA glue)."""
    ce0 = jnp.maximum(x, 0.0) + jnp.log1p(jnp.exp(-jnp.abs(x)))
    p = jax.nn.sigmoid(x)
    return (1.0 - FOCAL_ALPHA) * ce0 * p ** FOCAL_GAMMA


# ------------------------- fused, jitted forward glue -------------------------

@jax.jit
def _criterion_fused(logits_list, boxes_list, match_row, match_cls, match_mask,
                     match_tgt, img_pad, num_boxes):
    """All heads, all losses, ONE XLA program with ONE pallas_call.

    logits_list : tuple of H arrays (B, N, C)
    boxes_list  : tuple of H arrays (B, N, 4)   xyxy, un-normalized
    match_row   : (H, Mp) i32  flat proposal index (b*N + src) of each match
    match_cls   : (H, Mp) i32  GT class of each match
    match_mask  : (H, Mp) f32  1 for real matches, 0 for padding
    match_tgt   : (H, Mp, 4) f32  matched GT boxes (xyxy, un-normalized)
    img_pad     : (Mp, 4) f32  image sizes per match row (1 for padding)
    num_boxes   : () f32
    """
    H = len(logits_list)
    B, N, C = logits_list[0].shape
    R = B * N
    Mp = match_row.shape[1]

    logits_all = jnp.stack([jnp.reshape(l, (R, C)) for l in logits_list])
    boxes_all = jnp.stack([jnp.reshape(b.astype(jnp.float32), (R, 4))
                           for b in boxes_list])

    # ---- focal kernel input: bf16, flattened, (-100)-padded, (H, Kp, 128) ---
    E = R * C
    K = _cdiv(E, _LANES)
    KT = _cdiv(K, _TK_MAX)
    TK = _round_up(_cdiv(K, KT), 16)   # bf16 sublane packing -> multiple of 16
    Kp = KT * TK
    Ep = Kp * _LANES

    logits_q = logits_all.astype(jnp.bfloat16)
    x_flat = logits_q.reshape(H, E)
    if Ep > E:
        x_flat = jnp.pad(x_flat, ((0, 0), (0, Ep - E)),
                         constant_values=_LOGIT_PAD)
    x_tiles = x_flat.reshape(H, Kp, _LANES)

    # ---- box kernel input: normalized + packed (H, 8, Mp) f32 --------------
    idx3 = jnp.broadcast_to(match_row[:, :, None], (H, Mp, 4)).astype(jnp.int32)
    src = jnp.take_along_axis(boxes_all, idx3, axis=1)            # (H, Mp, 4)
    m3 = match_mask[:, :, None] > 0.0
    unit = jnp.array([0.0, 0.0, 1.0, 1.0], jnp.float32)
    src_n = jnp.where(m3, src / img_pad, unit)
    tgt_n = jnp.where(m3, match_tgt.astype(jnp.float32) / img_pad, unit)
    box_packed = jnp.concatenate(
        [jnp.transpose(src_n, (0, 2, 1)), jnp.transpose(tgt_n, (0, 2, 1))],
        axis=1)                                                   # (H, 8, Mp)

    # ---- single Pallas launch: grid = (heads, focal K-tiles) ----------------
    ce_s, giou_s, l1_s = pl.pallas_call(
        _criterion_kernel,
        out_shape=(jax.ShapeDtypeStruct((H, 1, 1), jnp.float32),
                   jax.ShapeDtypeStruct((H, 1, 1), jnp.float32),
                   jax.ShapeDtypeStruct((H, 1, 1), jnp.float32)),
        grid=(H, KT),
        in_specs=[pl.BlockSpec((1, TK, _LANES), lambda h, kt: (h, kt, 0)),
                  pl.BlockSpec((1, 8, Mp), lambda h, kt: (h, 0, 0))],
        out_specs=(pl.BlockSpec((1, 1, 1), lambda h, kt: (h, 0, 0)),
                   pl.BlockSpec((1, 1, 1), lambda h, kt: (h, 0, 0)),
                   pl.BlockSpec((1, 1, 1), lambda h, kt: (h, 0, 0))),
        compiler_params=pltpu.CompilerParams(
            dimension_semantics=("parallel", "arbitrary")),
    )(x_tiles, box_packed)

    # ---- tiny positive-class correction (M matched entries per head) -------
    # total focal = sum_all loss_neg(x) + sum_pos [loss_pos(x) - loss_neg(x)]
    # loss_pos uses the original f32 logits; loss_neg subtracts the same
    # bf16-quantized value the kernel saw.
    h_ix = jnp.arange(H, dtype=jnp.int32)[:, None]
    x_pos = logits_all[h_ix, match_row, match_cls]                      # f32
    x_pos_q = logits_q[h_ix, match_row, match_cls].astype(jnp.float32)  # bf16->f32
    corr = jnp.sum(match_mask * (_focal_pos(x_pos) - _focal_neg(x_pos_q)), axis=1)

    inv_nb = 1.0 / num_boxes
    ce = (ce_s[:, 0, 0] + corr) * inv_nb
    giou = giou_s[:, 0, 0] * inv_nb
    l1 = l1_s[:, 0, 0] * inv_nb
    return ce, giou, l1


# -------------------------------- SetCriterion --------------------------------

class SetCriterionPallas:
    """JAX/Pallas port of SparseRCNN's SetCriterion forward pass (use_focal=True).

    `max_matches` is a STATIC cap on the total number of matched GT boxes per
    batch (padded up to a multiple of 128).  Keeping it fixed across steps
    keeps every Pallas block shape static -> no Mosaic recompiles when the GT
    count changes.
    """

    def __init__(self, num_classes, matcher, weight_dict, eos_coef, losses,
                 use_focal=True, max_matches=128):
        self.num_classes = num_classes
        self.matcher = matcher
        self.weight_dict = weight_dict
        self.eos_coef = eos_coef
        self.losses = losses
        self.use_focal = use_focal
        self.max_matches = _round_up(max(int(max_matches), 1), _LANES)
        if not use_focal:
            # TODO(synk): use_focal=False branch (weighted cross_entropy with
            # the `empty_weight` buffer) not implemented; SparseRCNN default
            # is focal.
            raise NotImplementedError("only use_focal=True is implemented")

    @staticmethod
    def _get_src_permutation_idx(indices):
        batch_idx = np.concatenate(
            [np.full(len(np.asarray(src)), i, np.int32)
             for i, (src, _) in enumerate(indices)])
        src_idx = np.concatenate([np.asarray(src, np.int32) for src, _ in indices])
        return batch_idx, src_idx

    # -- single host-side packing pass -> one small batch of device arrays ----
    def _build_inputs(self, head_outs, targets, all_indices):
        # TODO(synk): the Hungarian matcher runs host-side (as in the PyTorch
        # reference); if it were ported to device this packing could run
        # on-device too and the per-step host<->device traffic would vanish.
        H = len(head_outs)
        B, N, _ = head_outs[0]['pred_logits'].shape
        Mp = self.max_matches

        match_row = np.zeros((H, Mp), np.int32)
        match_cls = np.zeros((H, Mp), np.int32)
        match_mask = np.zeros((H, Mp), np.float32)
        match_tgt = np.zeros((H, Mp, 4), np.float32)
        img_pad = np.ones((Mp, 4), np.float32)     # 1 -> safe divide for padding

        # Reference builds image_size by plain concatenation of
        # image_size_xyxy_tgt (one constant row per GT); SparseRCNN matches
        # every GT in every head, so this aligns row-for-row with the matched
        # boxes for all heads.
        img_cat = np.concatenate(
            [np.asarray(t['image_size_xyxy_tgt'], np.float32) for t in targets],
            axis=0)
        assert img_cat.shape[0] <= Mp, "increase max_matches"
        img_pad[:img_cat.shape[0]] = img_cat

        for h, indices in enumerate(all_indices):
            bidx, sidx = self._get_src_permutation_idx(indices)
            m = int(sidx.shape[0])
            assert m <= Mp, "increase max_matches"
            if m == 0:
                continue
            match_row[h, :m] = bidx * N + sidx
            match_cls[h, :m] = np.concatenate(
                [np.asarray(t['labels'])[np.asarray(j, np.int32)]
                 for t, (_, j) in zip(targets, indices)]).astype(np.int32)
            match_tgt[h, :m] = np.concatenate(
                [np.asarray(t['boxes_xyxy'], np.float32)[np.asarray(j, np.int32)]
                 for t, (_, j) in zip(targets, indices)], axis=0)
            match_mask[h, :m] = 1.0

        logits_list = tuple(o['pred_logits'] for o in head_outs)
        boxes_list = tuple(o['pred_boxes'] for o in head_outs)
        return (logits_list, boxes_list,
                jnp.asarray(match_row), jnp.asarray(match_cls),
                jnp.asarray(match_mask), jnp.asarray(match_tgt),
                jnp.asarray(img_pad))

    # -- forward ---------------------------------------------------------------
    def forward(self, outputs, targets):
        assert set(self.losses) <= {'labels', 'boxes'}, \
            f'unsupported losses: {self.losses}'
        outputs_without_aux = {k: v for k, v in outputs.items() if k != 'aux_outputs'}
        indices = self.matcher(outputs_without_aux, targets)
        num_boxes = max(float(sum(len(t['labels']) for t in targets)), 1.0)
        # single device: world_size == 1, no all_reduce of num_boxes

        heads = [(outputs, indices, '')]
        if 'aux_outputs' in outputs:
            for i, aux in enumerate(outputs['aux_outputs']):
                heads.append((aux, self.matcher(aux, targets), f'_{i}'))
        head_outs = [h for h, _, _ in heads]
        all_indices = [ind for _, ind, _ in heads]

        packed = self._build_inputs(head_outs, targets, all_indices)
        ce, giou, l1 = _criterion_fused(*packed,
                                        jnp.asarray(num_boxes, jnp.float32))

        losses = {}
        for k, (_, _, suf) in enumerate(heads):
            if 'labels' in self.losses:
                losses['loss_ce' + suf] = ce[k]
            if 'boxes' in self.losses:
                losses['loss_giou' + suf] = giou[k]
                losses['loss_bbox' + suf] = l1[k]
        return losses


# ------------------------------ numpy reference -------------------------------

def _ref_loss_for(pred_logits, pred_boxes, targets, indices, num_boxes,
                  num_classes, alpha, gamma):
    pred_logits = np.asarray(pred_logits, np.float64)
    pred_boxes = np.asarray(pred_boxes, np.float64)
    B, N, C = pred_logits.shape
    batch_idx = np.concatenate([np.full(len(s), b) for b, (s, _) in enumerate(indices)])
    src_idx = np.concatenate([np.asarray(s) for s, _ in indices])
    labels_o = np.concatenate(
        [np.asarray(t['labels'])[np.asarray(j)] for t, (_, j) in zip(targets, indices)])
    target_classes = np.full((B, N), num_classes, np.int64)
    target_classes[batch_idx, src_idx] = labels_o

    x = pred_logits.reshape(B * N, C)
    tc = target_classes.reshape(B * N)
    labels = np.zeros_like(x)
    pos = np.nonzero(tc != num_classes)[0]
    labels[pos, tc[pos]] = 1.0
    p = 1.0 / (1.0 + np.exp(-x))
    ce = np.maximum(x, 0) - x * labels + np.log1p(np.exp(-np.abs(x)))
    p_t = p * labels + (1 - p) * (1 - labels)
    loss = ce * (1 - p_t) ** gamma
    alpha_t = alpha * labels + (1 - alpha) * (1 - labels)
    loss_ce = (alpha_t * loss).sum() / num_boxes

    src = pred_boxes[batch_idx, src_idx]
    tgt = np.concatenate([np.asarray(t['boxes_xyxy'])[np.asarray(j)]
                          for t, (_, j) in zip(targets, indices)], 0).astype(np.float64)
    img = np.concatenate([np.asarray(t['image_size_xyxy_tgt'])
                          for t in targets], 0).astype(np.float64)
    area_s = (src[:, 2] - src[:, 0]) * (src[:, 3] - src[:, 1])
    area_t = (tgt[:, 2] - tgt[:, 0]) * (tgt[:, 3] - tgt[:, 1])
    iw = np.clip(np.minimum(src[:, 2], tgt[:, 2]) - np.maximum(src[:, 0], tgt[:, 0]), 0, None)
    ih = np.clip(np.minimum(src[:, 3], tgt[:, 3]) - np.maximum(src[:, 1], tgt[:, 1]), 0, None)
    inter = iw * ih
    union = area_s + area_t - inter
    iou = inter / union
    cw = np.clip(np.maximum(src[:, 2], tgt[:, 2]) - np.minimum(src[:, 0], tgt[:, 0]), 0, None)
    ch = np.clip(np.maximum(src[:, 3], tgt[:, 3]) - np.minimum(src[:, 1], tgt[:, 1]), 0, None)
    area_c = cw * ch
    giou = iou - (area_c - union) / area_c
    loss_giou = (1 - giou).sum() / num_boxes
    loss_bbox = np.abs(src / img - tgt / img).sum() / num_boxes
    return {'loss_ce': loss_ce, 'loss_giou': loss_giou, 'loss_bbox': loss_bbox}


# ------------------------------------ main -------------------------------------

if __name__ == "__main__":
    key = jax.random.PRNGKey(0)
    ks = jax.random.split(key, 8)
    B, N, C = 2, 8, NUM_CLASSES
    W, H = 64.0, 48.0

    def rand_boxes(k, shape_prefix):
        k1, k2 = jax.random.split(k)
        x1y1 = jax.random.uniform(k1, shape_prefix + (2,), jnp.float32) * \
            jnp.array([W * 0.5, H * 0.5], jnp.float32)
        wh = jax.random.uniform(k2, shape_prefix + (2,), jnp.float32) * \
            jnp.array([W * 0.4, H * 0.4], jnp.float32) + 2.0
        return jnp.concatenate([x1y1, x1y1 + wh], axis=-1)

    outputs = {
        'pred_logits': jax.random.normal(ks[0], (B, N, C), jnp.float32),
        'pred_boxes': rand_boxes(ks[1], (B, N)),
        'aux_outputs': [{
            'pred_logits': jax.random.normal(ks[2], (B, N, C), jnp.float32),
            'pred_boxes': rand_boxes(ks[3], (B, N)),
        }],
    }

    num_tgts = [3, 2]
    targets = []
    for b, T in enumerate(num_tgts):
        kb = jax.random.fold_in(ks[4], b)
        kl, kbx = jax.random.split(kb)
        labels = np.asarray(jax.random.randint(kl, (T,), 0, NUM_CLASSES), np.int32)
        boxes = np.asarray(rand_boxes(kbx, (T,)), np.float32)
        targets.append({
            'labels': labels,
            'boxes_xyxy': boxes,
            'image_size_xyxy_tgt': np.tile(np.array([[W, H, W, H]], np.float32), (T, 1)),
        })

    def simple_matcher(outputs_wo_aux, tgts):
        # TODO(synk): Hungarian matching (scipy linear_sum_assignment over the
        # class/L1/GIoU cost matrix) runs host-side in the reference model;
        # replaced here with a deterministic assignment (proposal i <- target i).
        return [(np.arange(len(t['labels']), dtype=np.int32),
                 np.arange(len(t['labels']), dtype=np.int32)) for t in tgts]

    criterion = SetCriterionPallas(
        num_classes=NUM_CLASSES, matcher=simple_matcher,
        weight_dict={'loss_ce': 2.0, 'loss_bbox': 5.0, 'loss_giou': 2.0},
        eos_coef=0.1, losses=['labels', 'boxes'], use_focal=True,
        max_matches=16)

    losses = criterion.forward(outputs, targets)
    for v in losses.values():
        jax.block_until_ready(v)

    # Verify against a pure-numpy (float64) reference.  Tolerance accounts for
    # the bf16 quantization of the all-negative logit stream and the approx
    # reciprocal used for the in-kernel sigmoid (both << 5e-3 at these shapes).
    indices = simple_matcher(outputs, targets)
    num_boxes = max(float(sum(len(t['labels']) for t in targets)), 1.0)
    ref = _ref_loss_for(outputs['pred_logits'], outputs['pred_boxes'], targets, indices,
                        num_boxes, NUM_CLASSES, FOCAL_ALPHA, FOCAL_GAMMA)
    ref_aux = _ref_loss_for(outputs['aux_outputs'][0]['pred_logits'],
                            outputs['aux_outputs'][0]['pred_boxes'], targets, indices,
                            num_boxes, NUM_CLASSES, FOCAL_ALPHA, FOCAL_GAMMA)
    ref.update({k + '_0': v for k, v in ref_aux.items()})
    for k, v in ref.items():
        np.testing.assert_allclose(np.asarray(losses[k]), v, rtol=5e-3, atol=5e-3)

    print("KERNEL_OK")
</pallas_src>

<mosaic_0001>
module attributes {stable_mosaic.version = 11 : i64} {
  func.func @_criterion_kernel(%arg0: i32, %arg1: i32, %arg2: memref<1x16x128xbf16, #tpu.memory_space<vmem>>, %arg3: memref<1x8x128xf32, #tpu.memory_space<vmem>>, %arg4: memref<1x1x1xf32, #tpu.memory_space<vmem>>, %arg5: memref<1x1x1xf32, #tpu.memory_space<vmem>>, %arg6: memref<1x1x1xf32, #tpu.memory_space<vmem>>) attributes {dimension_semantics = [#tpu.dimension_semantics<parallel>, #tpu.dimension_semantics<arbitrary>], iteration_bounds = array<i64: 2, 1>, scalar_prefetch = 0 : i64, scratch_operands = 0 : i64, tpu.core_type = #tpu.core_type<tc>, window_params = [{transform_indices = @transform_0, window_bounds = array<i64: 1, 16, 128>}, {transform_indices = @transform_1, window_bounds = array<i64: 1, 8, 128>}, {transform_indices = @transform_2, window_bounds = array<i64: 1, 1, 1>}, {transform_indices = @transform_3, window_bounds = array<i64: 1, 1, 1>}, {transform_indices = @transform_4, window_bounds = array<i64: 1, 1, 1>}]} {
    %c0 = arith.constant 0 : index
    %c0_0 = arith.constant 0 : index
    %c0_1 = arith.constant 0 : index
    %0 = vector.load %arg2[%c0, %c0_0, %c0_1] : memref<1x16x128xbf16, #tpu.memory_space<vmem>>, vector<1x16x128xbf16>
    %1 = arith.extf %0 : vector<1x16x128xbf16> to vector<1x16x128xf32>
    %2 = math.absf %1 : vector<1x16x128xf32>
    %cst = arith.constant 0.000000e+00 : f32
    %3 = vector.broadcast %cst : f32 to vector<1x16x128xf32>
    %4 = arith.subf %3, %2 : vector<1x16x128xf32>
    %5 = math.exp %4 : vector<1x16x128xf32>
    %cst_2 = arith.constant 1.000000e+00 : f32
    %6 = vector.broadcast %cst_2 : f32 to vector<1x16x128xf32>
    %7 = arith.addf %6, %5 : vector<1x16x128xf32>
    %cst_3 = arith.constant 0.000000e+00 : f32
    %8 = vector.broadcast %cst_3 : f32 to vector<1x16x128xf32>
    %9 = arith.maximumf %1, %8 : vector<1x16x128xf32>
    %10 = math.log %7 : vector<1x16x128xf32>
    %11 = arith.addf %9, %10 : vector<1x16x128xf32>
    %12 = tpu.reciprocal %7 {approx = true} : vector<1x16x128xf32> -> vector<1x16x128xf32>
    %cst_4 = arith.constant 0.000000e+00 : f32
    %13 = vector.broadcast %cst_4 : f32 to vector<1x16x128xf32>
    %14 = arith.cmpf oge, %1, %13 : vector<1x16x128xf32>
    %15 = arith.mulf %5, %12 : vector<1x16x128xf32>
    %16 = arith.select %14, %12, %15 : vector<1x16x128xi1>, vector<1x16x128xf32>
    %17 = arith.mulf %16, %16 : vector<1x16x128xf32>
    %18 = arith.mulf %11, %17 : vector<1x16x128xf32>
    %19 = vector.shape_cast %18 : vector<1x16x128xf32> to vector<1x1x16x128xf32>
    %cst_5 = arith.constant dense<0.000000e+00> : vector<1xf32>
    %20 = vector.multi_reduction <add>, %19, %cst_5 [1, 2, 3] : vector<1x1x16x128xf32> to vector<1xf32>
    %21 = vector.shape_cast %20 : vector<1xf32> to vector<1x1x1x1xf32>
    %22 = vector.extract %21[0, 0, 0, 0] : f32 from vector<1x1x1x1xf32>
    %23 = vector.broadcast %22 : f32 to vector<1x1x1xf32>
    %cst_6 = arith.constant 7.500000e-01 : f32
    %24 = vector.broadcast %cst_6 : f32 to vector<1x1x1xf32>
    %25 = arith.mulf %24, %23 : vector<1x1x1xf32>
    %c0_i32 = arith.constant 0 : i32
    %26 = arith.cmpi eq, %arg1, %c0_i32 : i32
    %27 = arith.extui %26 : i1 to i32
    %c0_i32_7 = arith.constant 0 : i32
    %28 = arith.cmpi ne, %27, %c0_i32_7 : i32
    scf.if %28 {
      %cst_16 = arith.constant 0.000000e+00 : f32
      %35 = vector.broadcast %cst_16 : f32 to vector<1x1x1xf32>
      %c0_17 = arith.constant 0 : index
      %c0_18 = arith.constant 0 : index
      %c0_19 = arith.constant 0 : index
      %36 = vector.load %arg4[%c0_17, %c0_18, %c0_19] : memref<1x1x1xf32, #tpu.memory_space<vmem>>, vector<1x1x1xf32>
      tpu.vector_store %arg4[%c0_17, %c0_18, %c0_19], %35 {strides = array<i32>} : memref<1x1x1xf32, #tpu.memory_space<vmem>>, vector<1x1x1xf32>,
    } else {
    }
    %c0_8 = arith.constant 0 : index
    %c0_9 = arith.constant 0 : index
    %c0_10 = arith.constant 0 : index
    %29 = vector.load %arg4[%c0_8, %c0_9, %c0_10] : memref<1x1x1xf32, #tpu.memory_space<vmem>>, vector<1x1x1xf32>
    %30 = arith.addf %29, %25 : vector<1x1x1xf32>
    %c0_11 = arith.constant 0 : index
    %c0_12 = arith.constant 0 : index
    %c0_13 = arith.constant 0 : index
    %31 = vector.load %arg4[%c0_11, %c0_12, %c0_13] : memref<1x1x1xf32, #tpu.memory_space<vmem>>, vector<1x1x1xf32>
    tpu.vector_store %arg4[%c0_11, %c0_12, %c0_13], %30 {strides = array<i32>} : memref<1x1x1xf32, #tpu.memory_space<vmem>>, vector<1x1x1xf32>,
    %c0_i32_14 = arith.constant 0 : i32
    %32 = arith.cmpi eq, %arg1, %c0_i32_14 : i32
    %33 = arith.extui %32 : i1 to i32
    %c0_i32_15 = arith.constant 0 : i32
    %34 = arith.cmpi ne, %33, %c0_i32_15 : i32
    scf.if %34 {
      %c0_16 = arith.constant 0 : index
      %c0_17 = arith.constant 0 : index
      %c0_18 = arith.constant 0 : index
      %35 = vector.load %arg3[%c0_16, %c0_17, %c0_18] : memref<1x8x128xf32, #tpu.memory_space<vmem>>, vector<1x8x128xf32>
      %36 = vector.extract_strided_slice %35 {offsets = [0, 0, 0], sizes = [1, 1, 128], strides = [1, 1, 1]} : vector<1x8x128xf32> to vector<1x1x128xf32>
      %37 = vector.extract_strided_slice %35 {offsets = [0, 1, 0], sizes = [1, 1, 128], strides = [1, 1, 1]} : vector<1x8x128xf32> to vector<1x1x128xf32>
      %38 = vector.extract_strided_slice %35 {offsets = [0, 2, 0], sizes = [1, 1, 128], strides = [1, 1, 1]} : vector<1x8x128xf32> to vector<1x1x128xf32>
      %39 = vector.extract_strided_slice %35 {offsets = [0, 3, 0], sizes = [1, 1, 128], strides = [1, 1, 1]} : vector<1x8x128xf32> to vector<1x1x128xf32>
      %40 = vector.extract_strided_slice %35 {offsets = [0, 4, 0], sizes = [1, 1, 128], strides = [1, 1, 1]} : vector<1x8x128xf32> to vector<1x1x128xf32>
      %41 = vector.extract_strided_slice %35 {offsets = [0, 5, 0], sizes = [1, 1, 128], strides = [1, 1, 1]} : vector<1x8x128xf32> to vector<1x1x128xf32>
      %42 = vector.extract_strided_slice %35 {offsets = [0, 6, 0], sizes = [1, 1, 128], strides = [1, 1, 1]} : vector<1x8x128xf32> to vector<1x1x128xf32>
      %43 = vector.extract_strided_slice %35 {offsets = [0, 7, 0], sizes = [1, 1, 128], strides = [1, 1, 1]} : vector<1x8x128xf32> to vector<1x1x128xf32>
      %44 = arith.subf %38, %36 : vector<1x1x128xf32>
      %45 = arith.subf %39, %37 : vector<1x1x128xf32>
      %46 = arith.mulf %44, %45 : vector<1x1x128xf32>
      %47 = arith.subf %42, %40 : vector<1x1x128xf32>
      %48 = arith.subf %43, %41 : vector<1x1x128xf32>
      %49 = arith.mulf %47, %48 : vector<1x1x128xf32>
      %50 = arith.minimumf %38, %42 : vector<1x1x128xf32>
      %51 = arith.maximumf %36, %40 : vector<1x1x128xf32>
      %52 = arith.subf %50, %51 : vector<1x1x128xf32>
      %cst_19 = arith.constant 0.000000e+00 : f32
      %53 = vector.broadcast %cst_19 : f32 to vector<1x1x128xf32>
      %54 = arith.maximumf %52, %53 : vector<1x1x128xf32>
      %55 = arith.minimumf %39, %43 : vector<1x1x128xf32>
      %56 = arith.maximumf %37, %41 : vector<1x1x128xf32>
      %57 = arith.subf %55, %56 : vector<1x1x128xf32>
      %cst_20 = arith.constant 0.000000e+00 : f32
      %58 = vector.broadcast %cst_20 : f32 to vector<1x1x128xf32>
      %59 = arith.maximumf %57, %58 : vector<1x1x128xf32>
      %60 = arith.mulf %54, %59 : vector<1x1x128xf32>
      %61 = arith.addf %46, %49 : vector<1x1x128xf32>
      %62 = arith.subf %61, %60 : vector<1x1x128xf32>
      %cst_21 = arith.constant 0.000000e+00 : f32
      %63 = vector.broadcast %cst_21 : f32 to vector<1x1x128xf32>
      %64 = arith.cmpf ogt, %62, %63 : vector<1x1x128xf32>
      %cst_22 = arith.constant 1.000000e+00 : f32
      %65 = vector.broadcast %cst_22 : f32 to vector<1x1x128xf32>
      %66 = arith.select %64, %62, %65 : vector<1x1x128xi1>, vector<1x1x128xf32>
      %67 = arith.divf %60, %66 : vector<1x1x128xf32>
      %68 = arith.maximumf %38, %42 : vector<1x1x128xf32>
      %69 = arith.minimumf %36, %40 : vector<1x1x128xf32>
      %70 = arith.subf %68, %69 : vector<1x1x128xf32>
      %cst_23 = arith.constant 0.000000e+00 : f32
      %71 = vector.broadcast %cst_23 : f32 to vector<1x1x128xf32>
      %72 = arith.maximumf %70, %71 : vector<1x1x128xf32>
      %73 = arith.maximumf %39, %43 : vector<1x1x128xf32>
      %74 = arith.minimumf %37, %41 : vector<1x1x128xf32>
      %75 = arith.subf %73, %74 : vector<1x1x128xf32>
      %cst_24 = arith.constant 0.000000e+00 : f32
      %76 = vector.broadcast %cst_24 : f32 to vector<1x1x128xf32>
      %77 = arith.maximumf %75, %76 : vector<1x1x128xf32>
      %78 = arith.mulf %72, %77 : vector<1x1x128xf32>
      %79 = arith.subf %78, %62 : vector<1x1x128xf32>
      %cst_25 = arith.constant 0.000000e+00 : f32
      %80 = vector.broadcast %cst_25 : f32 to vector<1x1x128xf32>
      %81 = arith.cmpf ogt, %78, %80 : vector<1x1x128xf32>
      %cst_26 = arith.constant 1.000000e+00 : f32
      %82 = vector.broadcast %cst_26 : f32 to vector<1x1x128xf32>
      %83 = arith.select %81, %78, %82 : vector<1x1x128xi1>, vector<1x1x128xf32>
      %84 = arith.divf %79, %83 : vector<1x1x128xf32>
      %85 = arith.subf %67, %84 : vector<1x1x128xf32>
      %cst_27 = arith.constant 1.000000e+00 : f32
      %86 = vector.broadcast %cst_27 : f32 to vector<1x1x128xf32>
      %87 = arith.subf %86, %85 : vector<1x1x128xf32>
      %88 = vector.shape_cast %87 : vector<1x1x128xf32> to vector<1x1x1x128xf32>
      %cst_28 = arith.constant dense<0.000000e+00> : vector<1xf32>
      %89 = vector.multi_reduction <add>, %88, %cst_28 [1, 2, 3] : vector<1x1x1x128xf32> to vector<1xf32>
      %90 = vector.shape_cast %89 : vector<1xf32> to vector<1x1x1x1xf32>
      %91 = vector.extract %90[0, 0, 0, 0] : f32 from vector<1x1x1x1xf32>
      %92 = vector.broadcast %91 : f32 to vector<1x1x1xf32>
      %c0_29 = arith.constant 0 : index
      %c0_30 = arith.constant 0 : index
      %c0_31 = arith.constant 0 : index
      %93 = vector.load %arg5[%c0_29, %c0_30, %c0_31] : memref<1x1x1xf32, #tpu.memory_space<vmem>>, vector<1x1x1xf32>
      tpu.vector_store %arg5[%c0_29, %c0_30, %c0_31], %92 {strides = array<i32>} : memref<1x1x1xf32, #tpu.memory_space<vmem>>, vector<1x1x1xf32>,
      %94 = vector.extract_strided_slice %35 {offsets = [0, 0, 0], sizes = [1, 4, 128], strides = [1, 1, 1]} : vector<1x8x128xf32> to vector<1x4x128xf32>
      %95 = vector.extract_strided_slice %35 {offsets = [0, 4, 0], sizes = [1, 4, 128], strides = [1, 1, 1]} : vector<1x8x128xf32> to vector<1x4x128xf32>
      %96 = arith.subf %94, %95 : vector<1x4x128xf32>
      %97 = math.absf %96 : vector<1x4x128xf32>
      %98 = vector.shape_cast %97 : vector<1x4x128xf32> to vector<1x1x4x128xf32>
      %cst_32 = arith.constant dense<0.000000e+00> : vector<1xf32>
      %99 = vector.multi_reduction <add>, %98, %cst_32 [1, 2, 3] : vector<1x1x4x128xf32> to vector<1xf32>
      %100 = vector.shape_cast %99 : vector<1xf32> to vector<1x1x1x1xf32>
      %101 = vector.extract %100[0, 0, 0, 0] : f32 from vector<1x1x1x1xf32>
      %102 = vector.broadcast %101 : f32 to vector<1x1x1xf32>
      %c0_33 = arith.constant 0 : index
      %c0_34 = arith.constant 0 : index
      %c0_35 = arith.constant 0 : index
      %103 = vector.load %arg6[%c0_33, %c0_34, %c0_35] : memref<1x1x1xf32, #tpu.memory_space<vmem>>, vector<1x1x1xf32>
      tpu.vector_store %arg6[%c0_33, %c0_34, %c0_35], %102 {strides = array<i32>} : memref<1x1x1xf32, #tpu.memory_space<vmem>>, vector<1x1x1xf32>,
    } else {
    }
    return
  }
  func.func @transform_0(%arg0: i32, %arg1: i32) -> (i32, i32, i32) {
    %c0_i32 = arith.constant 0 : i32
    %c0_i32_0 = arith.constant 0 : i32
    return %arg0, %arg1, %c0_i32 : i32, i32, i32
  }
  func.func @transform_1(%arg0: i32, %arg1: i32) -> (i32, i32, i32) {
    %c0_i32 = arith.constant 0 : i32
    %c0_i32_0 = arith.constant 0 : i32
    %c0_i32_1 = arith.constant 0 : i32
    return %arg0, %c0_i32, %c0_i32_0 : i32, i32, i32
  }
  func.func @transform_2(%arg0: i32, %arg1: i32) -> (i32, i32, i32) {
    %c0_i32 = arith.constant 0 : i32
    %c0_i32_0 = arith.constant 0 : i32
    %c0_i32_1 = arith.constant 0 : i32
    return %arg0, %c0_i32, %c0_i32_0 : i32, i32, i32
  }
  func.func @transform_3(%arg0: i32, %arg1: i32) -> (i32, i32, i32) {
    %c0_i32 = arith.constant 0 : i32
    %c0_i32_0 = arith.constant 0 : i32
    %c0_i32_1 = arith.constant 0 : i32
    return %arg0, %c0_i32, %c0_i32_0 : i32, i32, i32
  }
  func.func @transform_4(%arg0: i32, %arg1: i32) -> (i32, i32, i32) {
    %c0_i32 = arith.constant 0 : i32
    %c0_i32_0 = arith.constant 0 : i32
    %c0_i32_1 = arith.constant 0 : i32
    return %arg0, %c0_i32, %c0_i32_0 : i32, i32, i32
  }
}

</mosaic_0001>

<llo_original>
// kernel: _criterion_fused.1
$region0: #{_criterion_fused.1}
  #allocation0 [shape = 'u32[]', space=smem, size = 0x4, offset = 0x4, fixed_abs, tag = 'smem constant byte address 0x4 - core index']
  #allocation1 [shape = 'u32[144,128]{1,0:T(1,128)}', space=vmem, size = 0x12000, scoped, tag = 'internal scratch']
  %s0 = inlined_call_operand.vmem [shape: bf16[2,16,128], index: 0, kind: input, shape index: {}]
  %s1 = inlined_call_operand.vmem [shape: f32[2,8,128], index: 1, kind: input, shape index: {}]
  %s2 = inlined_call_operand.vmem [shape: f32[2,1,1], index: 2, kind: output, shape index: {0}]
  %s3 = inlined_call_operand.vmem [shape: f32[2,1,1], index: 3, kind: output, shape index: {1}]
  %s4 = inlined_call_operand.vmem [shape: f32[2,1,1], index: 4, kind: output, shape index: {2}]
  %5 = xla_tuple %s2, %s3, %s4
  %s6 = sld [smem:[#allocation0]]
  $region65: #{_criterion_fused.1} parent=0
    _
  %s8 = ssub.s32 1, %s6
  %s9 = scalar_select 0, %s8, %s6
  loop: start=0, step=1, limit=4
  $region2: #{_criterion_fused.1} parent=0 // loop_pre_header
    _
  $region3: #{_criterion_fused.1} parent=0 // loop_header
    %s11 = sphi 0, %s15
    %p12 = scmp.ge.s32.totalorder %s11, 4
    %s18 = sphi 0, %s30
    %s19 = sphi 0, %s26
    %s20 = sphi 0, %s18
    %s21 = sphi 0, %s19
    %s22 = sphi 0, %s20
    %s23 = sphi 0, %s21
    %s35 = sphi 0, %s37
    %s38 = sphi 0, %s35
    %s39 = sphi 0, %s38
    %s55 = sphi 0, %s39
    %s61 = sphi 0, %s63
    %s64 = sphi 0, %s61
    %s65 = sphi 0, %s64
    %s81 = sphi 0, %s65
    %s87 = sphi 0, %s89
    %s90 = sphi 0, %s87
    %s91 = sphi 0, %s90
    %s107 = sphi 0, %s91
    %s113 = sphi 0, %s115
    %s116 = sphi 0, %s113
    %s117 = sphi 0, %s116
    %s133 = sphi 0, %s117
    %s139 = sphi 0, %s141
    %s142 = sphi 0, %s139
    %s143 = sphi 0, %s142
    %s159 = sphi 0, %s143
  $region4: #{_criterion_fused.1} parent=0 // loop_header_branch
    %14 = sbr.rel (%p12) target = $region8
  $region5: #{_criterion_fused.1} parent=0 // loop_body
    %s16 = ssub.s32 %s11, 1
    %s17 = ssub.s32 %s11, 2
    %s24 = sadd.s32 1, %s19
    %p25 = scmp.ge.s32.totalorder %s24, 1
    %s26 = scalar_select %p25, 0, %s24
    %s27 = sadd.s32 1, %s18
    %s28 = scalar_select %p25, %s27, %s18
    %p29 = scmp.ge.s32.totalorder %s28, 2
    %s30 = scalar_select %p29, 0, %s28
    %s31 = ssub.s32 %s18, %s30
    %s32 = ssub.s32 %s19, %s26
    %s33 = sor.u32 %s31, %s32
    %p34 = scmp.eq.s32.totalorder %s33, 0
    %s36 = sadd.s32 %s35, 1
    %s37 = scalar_select %p34, %s35, %s36
    %p40 = pneg %p34
    %p41 = scmp.eq.s32.totalorder %s11, 1
    %p42 = por %p40, %p41
    %p43 = scmp.ne.s32.totalorder %s35, %s38
    %p44 = scmp.eq.s32.totalorder %s11, 0
    %p45 = por %p43, %p44
    %p46 = scmp.ne.s32.totalorder %s35, %s38
    %p47 = scmp.eq.s32.totalorder %s16, 1
    %p48 = por %p46, %p47
    %p49 = scmp.ne.s32.totalorder %s38, %s39
    %p50 = scmp.eq.s32.totalorder %s16, 0
    %p51 = por %p49, %p50
    %p52 = scmp.ne.s32.totalorder %s38, %s39
    %p53 = scmp.eq.s32.totalorder %s17, 1
    %p54 = por %p52, %p53
    %p56 = scmp.ne.s32.totalorder %s39, %s55
    %p57 = scmp.eq.s32.totalorder %s17, 0
    %p58 = por %p56, %p57
    %s59 = ssub.s32 %s18, %s30
    %p60 = scmp.eq.s32.totalorder %s59, 0
    %s62 = sadd.s32 %s61, 1
    %s63 = scalar_select %p60, %s61, %s62
    %p66 = pneg %p60
    %p67 = scmp.eq.s32.totalorder %s11, 1
    %p68 = por %p66, %p67
    %p69 = scmp.ne.s32.totalorder %s61, %s64
    %p70 = scmp.eq.s32.totalorder %s11, 0
    %p71 = por %p69, %p70
    %p72 = scmp.ne.s32.totalorder %s61, %s64
    %p73 = scmp.eq.s32.totalorder %s16, 1
    %p74 = por %p72, %p73
    %p75 = scmp.ne.s32.totalorder %s64, %s65
    %p76 = scmp.eq.s32.totalorder %s16, 0
    %p77 = por %p75, %p76
    %p78 = scmp.ne.s32.totalorder %s64, %s65
    %p79 = scmp.eq.s32.totalorder %s17, 1
    %p80 = por %p78, %p79
    %p82 = scmp.ne.s32.totalorder %s65, %s81
    %p83 = scmp.eq.s32.totalorder %s17, 0
    %p84 = por %p82, %p83
    %s85 = ssub.s32 %s18, %s30
    %p86 = scmp.eq.s32.totalorder %s85, 0
    %s88 = sadd.s32 %s87, 1
    %s89 = scalar_select %p86, %s87, %s88
    %p92 = pneg %p86
    %p93 = scmp.eq.s32.totalorder %s11, 1
    %p94 = por %p92, %p93
    %p95 = scmp.ne.s32.totalorder %s87, %s90
    %p96 = scmp.eq.s32.totalorder %s11, 0
    %p97 = por %p95, %p96
    %p98 = scmp.ne.s32.totalorder %s87, %s90
    %p99 = scmp.eq.s32.totalorder %s16, 1
    %p100 = por %p98, %p99
    %p101 = scmp.ne.s32.totalorder %s90, %s91
    %p102 = scmp.eq.s32.totalorder %s16, 0
    %p103 = por %p101, %p102
    %p104 = scmp.ne.s32.totalorder %s90, %s91
    %p105 = scmp.eq.s32.totalorder %s17, 1
    %p106 = por %p104, %p105
    %p108 = scmp.ne.s32.totalorder %s91, %s107
    %p109 = scmp.eq.s32.totalorder %s17, 0
    %p110 = por %p108, %p109
    %s111 = ssub.s32 %s18, %s30
    %p112 = scmp.eq.s32.totalorder %s111, 0
    %s114 = sadd.s32 %s113, 1
    %s115 = scalar_select %p112, %s113, %s114
    %p118 = pneg %p112
    %p119 = scmp.eq.s32.totalorder %s11, 1
    %p120 = por %p118, %p119
    %p121 = scmp.ne.s32.totalorder %s113, %s116
    %p122 = scmp.eq.s32.totalorder %s11, 0
    %p123 = por %p121, %p122
    %p124 = scmp.ne.s32.totalorder %s113, %s116
    %p125 = scmp.eq.s32.totalorder %s16, 1
    %p126 = por %p124, %p125
    %p127 = scmp.ne.s32.totalorder %s116, %s117
    %p128 = scmp.eq.s32.totalorder %s16, 0
    %p129 = por %p127, %p128
    %p130 = scmp.ne.s32.totalorder %s116, %s117
    %p131 = scmp.eq.s32.totalorder %s17, 1
    %p132 = por %p130, %p131
    %p134 = scmp.ne.s32.totalorder %s117, %s133
    %p135 = scmp.eq.s32.totalorder %s17, 0
    %p136 = por %p134, %p135
    %s137 = ssub.s32 %s18, %s30
    %p138 = scmp.eq.s32.totalorder %s137, 0
    %s140 = sadd.s32 %s139, 1
    %s141 = scalar_select %p138, %s139, %s140
    %p144 = pneg %p138
    %p145 = scmp.eq.s32.totalorder %s11, 1
    %p146 = por %p144, %p145
    %p147 = scmp.ne.s32.totalorder %s139, %s142
    %p148 = scmp.eq.s32.totalorder %s11, 0
    %p149 = por %p147, %p148
    %p150 = scmp.ne.s32.totalorder %s139, %s142
    %p151 = scmp.eq.s32.totalorder %s16, 1
    %p152 = por %p150, %p151
    %p153 = scmp.ne.s32.totalorder %s142, %s143
    %p154 = scmp.eq.s32.totalorder %s16, 0
    %p155 = por %p153, %p154
    %p156 = scmp.ne.s32.totalorder %s142, %s143
    %p157 = scmp.eq.s32.totalorder %s17, 1
    %p158 = por %p156, %p157
    %p160 = scmp.ne.s32.totalorder %s143, %s159
    %p161 = scmp.eq.s32.totalorder %s17, 0
    %p162 = por %p160, %p161
    %p163 = scmp.le.s32.totalorder 1, %s11
    %p164 = scmp.lt.s32.totalorder %s11, 3
    %p165 = pnand %p163, %p164
    %p166 = pneg %p165
    // Predicated region
    $region9: #{_criterion_fused.1} parent=5 // pred_check
      _
    $region10: #{_criterion_fused.1} parent=5 // pred_check_branch
      %168 = sbr.rel (%p165) target = $region12
    $region11: #{_criterion_fused.1} parent=5 // pred_region
      %s169 = ssub.s32 %s11, 1
    $region12: #{_criterion_fused.1} parent=5 // pred_fallthru
      _
    %p170 = scmp.lt.s32.totalorder %s11, 2
    // Predicated region
    $region13: #{_criterion_fused.1} parent=5 // pred_check
      %p171 = pneg %p170
    $region14: #{_criterion_fused.1} parent=5 // pred_check_branch
      %173 = sbr.rel (%p171) target = $region16
    $region15: #{_criterion_fused.1} parent=5 // pred_region
      // Predicated region
      $region17: #{_criterion_fused.1} parent=15 // pred_check
        %p174 = pneg %p45
      $region18: #{_criterion_fused.1} parent=15 // pred_check_branch
        %176 = sbr.rel (%p174) target = $region20
      $region19: #{_criterion_fused.1} parent=15 // pred_region
        %s177 = smul.u32 2, %s19
        %p178 = scmp.lt.s32.totalorder %s18, 1
        %s179 = scalar_select %p178, %s18, 1
        %p180 = scmp.lt.s32.totalorder %s177, 1
        %s181 = scalar_select %p180, %s177, 1
        %s182 = smul.addr %s179, 2
        %s183 = sadd.s32 %s181, %s182
        %s184 = smul.addr %s183, 4
        %s185 = scalar_lea.vmem %s0, %s184
        %s186 = smul.u32 2, %s19
      $region20: #{_criterion_fused.1} parent=15 // pred_fallthru
        _
      // Predicated region
      $region21: #{_criterion_fused.1} parent=15 // pred_check
        %p187 = pneg %p71
      $region22: #{_criterion_fused.1} parent=15 // pred_check_branch
        %189 = sbr.rel (%p187) target = $region24
      $region23: #{_criterion_fused.1} parent=15 // pred_region
        %p190 = scmp.lt.s32.totalorder %s18, 1
        %s191 = scalar_select %p190, %s18, 1
        %s192 = smul.addr %s191, 8
        %s193 = scalar_lea.vmem %s1, %s192
      $region24: #{_criterion_fused.1} parent=15 // pred_fallthru
        _
    $region16: #{_criterion_fused.1} parent=5 // pred_fallthru
      _
    %p194 = scmp.le.s32.totalorder 1, %s11
    %p195 = scmp.lt.s32.totalorder %s11, 3
    %p196 = pnand %p194, %p195
    %p197 = pneg %p196
    // Predicated region
    $region25: #{_criterion_fused.1} parent=5 // pred_check
      _
    $region26: #{_criterion_fused.1} parent=5 // pred_check_branch
      %199 = sbr.rel (%p196) target = $region28
    $region27: #{_criterion_fused.1} parent=5 // pred_region
      %s200 = ssub.s32 %s11, 1
      %s201 = smul.u32 2, %s21
      %p202 = scmp.lt.s32.totalorder %s20, 1
      %s203 = scalar_select %p202, %s20, 1
      %p204 = scmp.lt.s32.totalorder %s201, 1
      %s205 = scalar_select %p204, %s201, 1
      %s206 = smul.addr %s203, 2
      %s207 = sadd.s32 %s205, %s206
      %s208 = smul.addr %s207, 4
      %s209 = scalar_lea.vmem %s0, %s208
      %p210 = pneg %p51
      %p211 = pneg %p48
      %p212 = scmp.lt.s32.totalorder %s20, 1
      %s213 = scalar_select %p212, %s20, 1
      %s214 = smul.addr %s213, 8
      %s215 = scalar_lea.vmem %s1, %s214
      %p216 = pneg %p77
      %p217 = pneg %p74
      %p218 = pneg %p103
      %p219 = pneg %p100
      %p220 = scmp.lt.s32.totalorder %s20, 1
      %s221 = scalar_select %p220, %s20, 1
      %s222 = scalar_lea.vmem %s2, %s221
      %p223 = pneg %p129
      %p224 = pneg %p126
      %p225 = scmp.lt.s32.totalorder %s20, 1
      %s226 = scalar_select %p225, %s20, 1
      %s227 = scalar_lea.vmem %s3, %s226
      %p228 = pneg %p155
      %p229 = pneg %p152
      %p230 = scmp.lt.s32.totalorder %s20, 1
      %s231 = scalar_select %p230, %s20, 1
      %s232 = scalar_lea.vmem %s4, %s231
      %s233 = smul.u32 2, %s21
      %p234 = scmp.lt.s32.totalorder %s20, 1
      %s235 = scalar_select %p234, %s20, 1
      %p236 = scmp.lt.s32.totalorder %s233, 1
      %s237 = scalar_select %p236, %s233, 1
      %s238 = smul.addr %s235, 2
      %s239 = sadd.s32 %s237, %s238
      %s240 = smul.addr %s239, 4
      %s241 = scalar_lea.vmem %s0, %s240
      %s242 = smul.u32 2, %s21
      %p243 = scmp.lt.s32.totalorder %s20, 1
      %s244 = scalar_select %p243, %s20, 1
      %s245 = smul.addr %s244, 8
      %s246 = scalar_lea.vmem %s1, %s245
      %p247 = scmp.lt.s32.totalorder %s20, 1
      %s248 = scalar_select %p247, %s20, 1
      %s249 = scalar_lea.vmem %s2, %s248
      %p250 = scmp.lt.s32.totalorder %s20, 1
      %s251 = scalar_select %p250, %s20, 1
      %s252 = scalar_lea.vmem %s3, %s251
      %p253 = scmp.lt.s32.totalorder %s20, 1
      %s254 = scalar_select %p253, %s20, 1
      %s255 = scalar_lea.vmem %s4, %s254
      %v256 = vld [vmem:[%s241] sm:$0xf]
      %v257 = vld [vmem:[%s241 + $0x4] sm:$0xf]
      %v258 = vunpack.c.l.bf16 %v256
      %v259 = vunpack.c.l.bf16 %v257
      %v260 = vand.u32 2147483647, %v258
      %v261 = vand.u32 2147483647, %v259
      %v262 = vsub.f32 0.0, %v260
      %v263 = vsub.f32 0.0, %v261
      %v264 = vmul.f32 %v262, 1.442695
      %v265 = vpow.pop %v264
      %v266 = vmul.f32 %v263, 1.442695
      %v267 = vpow.pop %v266
      %v268 = vadd.f32 %v265, 1.0
      %v269 = vadd.f32 %v267, 1.0
      %v270 = vmax.f32 %v258, 0.0
      %v271 = vmax.f32 %v259, 0.0
      %v272 = vlog2.pop %v268
      %v273 = vmul.f32 %v272, 0.6931472
      %v274 = vlog2.pop %v269
      %v275 = vmul.f32 %v274, 0.6931472
      %v276 = vadd.f32 %v270, %v273
      %v277 = vadd.f32 %v271, %v275
      %v278 = vrcp.pop %v268
      %v279 = vrcp.pop %v269
      %vm280 = vcmp.ge.f32.partialorder %v258, 0.0
      %vm281 = vcmp.ge.f32.partialorder %v259, 0.0
      %v282 = vmul.f32 %v265, %v278
      %v283 = vmul.f32 %v267, %v279
      %v284 = vsel %vm280, %v278, %v282
      %v285 = vsel %vm281, %v279, %v283
      %v286 = vmul.f32 %v284, %v284
      %v287 = vmul.f32 %v285, %v285
      %v288 = vmul.f32 %v276, %v286
      %v289 = vmul.f32 %v277, %v287
      %v290 = vadd.f32 %v288, %v289
      %291 = vadd.xlane.f32.xlu0 %v290
      %v292 = vpop.xlane.xlu0 %291
      %v293 = vrot.slane %v292, 4
      %v294 = vadd.f32 %v292, %v293
      %v295 = vrot.slane %v294, 2
      %v296 = vadd.f32 %v294, %v295
      %v297 = vrot.slane %v296, 1
      %v298 = vadd.f32 %v296, %v297
      %s299 = vtos %v298
      %v300 = vstv %s299
      %v301 = vmul.f32 %v300, 0.75
      %p302 = scmp.eq.s32.totalorder %s21, 0
      // Predicated region
      $region29: #{_criterion_fused.1} parent=27 // pred_check
        %p303 = pneg %p302
      $region30: #{_criterion_fused.1} parent=27 // pred_check_branch
        %305 = sbr.rel (%p303) target = $region32
      $region31: #{_criterion_fused.1} parent=27 // pred_region
        %vm306 = vcmask 0
        %307 = vst.msk [vmem:[%s249] sm:$0x1] %vm306, 0.0
      $region32: #{_criterion_fused.1} parent=27 // pred_fallthru
        _
      %v308 = vld [vmem:[%s249] sm:$0x1]
      %v309 = vadd.f32 %v308, %v301
      %vm310 = vcmask 0
      %311 = vst.msk [vmem:[%s249] sm:$0x1] %vm310, %v309
      // Predicated region
      $region33: #{_criterion_fused.1} parent=27 // pred_check
        %p312 = pneg %p302
      $region34: #{_criterion_fused.1} parent=27 // pred_check_branch
        %314 = sbr.rel (%p312) target = $region36
      $region35: #{_criterion_fused.1} parent=27 // pred_region
        %v315 = vld [vmem:[%s246] sm:$0xff]
        %v317 = vrot.slane %v315, 6
        %v319 = vsub.f32 %v315, %v317
        %v321 = vrot.slane %v319, 1
        %v323 = vmul.f32 %v319, %v321
        %v324 = vrot.slane %v315, 4
        %v326 = vmin.f32 %v315, %v324
        %v327 = vmax.f32 %v315, %v324
        %v329 = vrot.slane %v327, 6
        %v331 = vsub.f32 %v326, %v329
        %v332 = vmax.f32 %v331, 0.0
        %v334 = vrot.slane %v332, 1
        %v336 = vmul.f32 %v332, %v334
        %v338 = vrot.slane %v323, 4
        %v340 = vadd.f32 %v323, %v338
        %v341 = vsub.f32 %v340, %v336
        %vm342 = vcmp.gt.f32.partialorder %v341, 0.0
        %v343 = vsel %vm342, %v341, 1.0
        %v344 = vrcp.pop %v343
        %v345 = vmul.f32 %v336, %v344
        %v347 = vrot.slane %v326, 6
        %v349 = vsub.f32 %v327, %v347
        %v350 = vmax.f32 %v349, 0.0
        %v352 = vrot.slane %v350, 1
        %v354 = vmul.f32 %v350, %v352
        %v355 = vsub.f32 %v354, %v341
        %vm356 = vcmp.gt.f32.partialorder %v354, 0.0
        %v357 = vsel %vm356, %v354, 1.0
        %v358 = vrcp.pop %v357
        %v359 = vmul.f32 %v355, %v358
        %v360 = vsub.f32 %v345, %v359
        %v361 = vsub.f32 1.0, %v360
        %v363 = vrot.slane %v361, 2
        %vm365 = vcmask 1040384
        %v366 = vsel %vm365, %v363, 0.0
        %367 = vadd.xlane.f32.xlu0 %v366
        %v368 = vpop.xlane.xlu0 %367
        %v369 = vrot.slane %v368, 4
        %v370 = vadd.f32 %v368, %v369
        %v371 = vrot.slane %v370, 2
        %v372 = vadd.f32 %v370, %v371
        %v373 = vrot.slane %v372, 1
        %v374 = vadd.f32 %v372, %v373
        %s375 = vtos %v374
        %v376 = vstv %s375
        %377 = vst.msk [vmem:[%s252] sm:$0x1] %vm310, %v376
        %v378 = vsub.f32 %v315, %v324
        %v379 = vand.u32 2147483647, %v378
        %vm380 = vcmask 1043456
        %v381 = vsel %vm380, %v379, 0.0
        %382 = vadd.xlane.f32.xlu0 %v381
        %v383 = vpop.xlane.xlu0 %382
        %v384 = vrot.slane %v383, 4
        %v385 = vadd.f32 %v383, %v384
        %v386 = vrot.slane %v385, 2
        %v387 = vadd.f32 %v385, %v386
        %v388 = vrot.slane %v387, 1
        %v389 = vadd.f32 %v387, %v388
        %s390 = vtos %v389
        %v391 = vstv %s390
        %392 = vst.msk [vmem:[%s255] sm:$0x1] %vm310, %v391
      $region36: #{_criterion_fused.1} parent=27 // pred_fallthru
        _
      %p393 = scmp.lt.s32.totalorder %s20, 1
      %s394 = scalar_select %p393, %s20, 1
      %s395 = scalar_lea.vmem %s2, %s394
      %p396 = scmp.lt.s32.totalorder %s20, 1
      %s397 = scalar_select %p396, %s20, 1
      %s398 = scalar_lea.vmem %s3, %s397
      %p399 = scmp.lt.s32.totalorder %s20, 1
      %s400 = scalar_select %p399, %s20, 1
      %s401 = scalar_lea.vmem %s4, %s400
      // Predicated region
      $region37: #{_criterion_fused.1} parent=27 // pred_check
        %p402 = pneg %p100
      $region38: #{_criterion_fused.1} parent=27 // pred_check_branch
        %404 = sbr.rel (%p402) target = $region40
      $region39: #{_criterion_fused.1} parent=27 // pred_region
        _
      $region40: #{_criterion_fused.1} parent=27 // pred_fallthru
        _
      // Predicated region
      $region41: #{_criterion_fused.1} parent=27 // pred_check
        %p405 = pneg %p126
      $region42: #{_criterion_fused.1} parent=27 // pred_check_branch
        %407 = sbr.rel (%p405) target = $region44
      $region43: #{_criterion_fused.1} parent=27 // pred_region
        _
      $region44: #{_criterion_fused.1} parent=27 // pred_fallthru
        _
      // Predicated region
      $region45: #{_criterion_fused.1} parent=27 // pred_check
        %p408 = pneg %p152
      $region46: #{_criterion_fused.1} parent=27 // pred_check_branch
        %410 = sbr.rel (%p408) target = $region48
      $region47: #{_criterion_fused.1} parent=27 // pred_region
        _
      $region48: #{_criterion_fused.1} parent=27 // pred_fallthru
        _
    $region28: #{_criterion_fused.1} parent=5 // pred_fallthru
      _
    %p411 = scmp.le.s32.totalorder 2, %s11
    // Predicated region
    $region49: #{_criterion_fused.1} parent=5 // pred_check
      %p412 = pneg %p411
    $region50: #{_criterion_fused.1} parent=5 // pred_check_branch
      %414 = sbr.rel (%p412) target = $region52
    $region51: #{_criterion_fused.1} parent=5 // pred_region
      %s415 = ssub.s32 %s11, 2
      // Predicated region
      $region53: #{_criterion_fused.1} parent=51 // pred_check
        %p416 = pneg %p106
      $region54: #{_criterion_fused.1} parent=51 // pred_check_branch
        %418 = sbr.rel (%p416) target = $region56
      $region55: #{_criterion_fused.1} parent=51 // pred_region
        %p419 = scmp.lt.s32.totalorder %s22, 1
        %s420 = scalar_select %p419, %s22, 1
        %s421 = scalar_lea.vmem %s2, %s420
      $region56: #{_criterion_fused.1} parent=51 // pred_fallthru
        _
      // Predicated region
      $region57: #{_criterion_fused.1} parent=51 // pred_check
        %p422 = pneg %p132
      $region58: #{_criterion_fused.1} parent=51 // pred_check_branch
        %424 = sbr.rel (%p422) target = $region60
      $region59: #{_criterion_fused.1} parent=51 // pred_region
        %p425 = scmp.lt.s32.totalorder %s22, 1
        %s426 = scalar_select %p425, %s22, 1
        %s427 = scalar_lea.vmem %s3, %s426
      $region60: #{_criterion_fused.1} parent=51 // pred_fallthru
        _
      // Predicated region
      $region61: #{_criterion_fused.1} parent=51 // pred_check
        %p428 = pneg %p158
      $region62: #{_criterion_fused.1} parent=51 // pred_check_branch
        %430 = sbr.rel (%p428) target = $region64
      $region63: #{_criterion_fused.1} parent=51 // pred_region
        %p431 = scmp.lt.s32.totalorder %s22, 1
        %s432 = scalar_select %p431, %s22, 1
        %s433 = scalar_lea.vmem %s4, %s432
      $region64: #{_criterion_fused.1} parent=51 // pred_fallthru
        _
    $region52: #{_criterion_fused.1} parent=5 // pred_fallthru
      _
  $region6: #{_criterion_fused.1} parent=0 // loop_footer
    %s15 = sadd.s32 1, %s11
  $region7: #{_criterion_fused.1} parent=0 // loop_footer_branch
    %10 = sbr.rel target = $region3
  $region8: #{_criterion_fused.1} parent=0 // loop_exit
    _

</llo_original>
